<compile_context>
chip_gen: v7x
topology: tpu7x:2x2x1
jax: 0.10.0
libtpu: 0.0.40
codegen_flags: <defaults>
</compile_context>

<pallas_src>
import jax
import jax.numpy as jnp
from jax.experimental import pallas as pl
from jax.experimental.pallas import tpu as pltpu

BETA = 0.96       # tau
THRESHOLD = 1.0


def snn2_forward(x, w1t, w2t):
    """x: (T, B, INPUT) f32; w1t: (INPUT, HID); w2t: (HID, OUT). Returns (T, B, OUT)."""
    T, B, N = x.shape
    H = w1t.shape[1]
    O = w2t.shape[1]

    # Time and batch are fused for the matmuls; contiguous reshape (free in XLA).
    x_flat = x.reshape(T * B, N)

    def kernel(x_ref, w1t_ref, w2t_ref, out_ref, cur1_ref, spk1_ref):
        # ---- fc1 for ALL timesteps in one MXU call (dropout = identity, eval mode).
        # TODO(synk): training-mode dropout (p=0.3) not implemented (inference semantics).
        cur1_ref[...] = jnp.dot(
            x_ref[...], w1t_ref[...], preferred_element_type=jnp.float32
        )  # (T*B, H)

        # ---- lif1 recurrence (VPU-only): leaky integrate, zero-reset, fire.
        # T is a small compile-time constant -> static unroll, static ref slices.
        mem1 = jnp.zeros((B, H), jnp.float32)
        for t in range(T):
            cur1_t = cur1_ref[pl.ds(t * B, B), :]
            base = BETA * mem1 + cur1_t
            # reset computed from PREVIOUS mem (snnTorch zero-reset semantics)
            mem1 = jnp.where(mem1 > THRESHOLD, 0.0, base)
            spk1_ref[pl.ds(t * B, B), :] = (mem1 > THRESHOLD).astype(jnp.float32)

        # ---- fc_out for ALL timesteps in one MXU call, written straight to the
        # resident output block.
        out_ref[...] = jnp.dot(
            spk1_ref[...], w2t_ref[...], preferred_element_type=jnp.float32
        )  # (T*B, O) holding cur2[t] for every t

        # ---- lif_out (reset_mechanism='none'): mem2[t] = beta*mem2[t-1] + cur2[t].
        # Pure linear recurrence -> in-place prefix scan over the VMEM output slab.
        for t in range(1, T):
            prev = out_ref[pl.ds((t - 1) * B, B), :]
            out_ref[pl.ds(t * B, B), :] = BETA * prev + out_ref[pl.ds(t * B, B), :]

    out_flat = pl.pallas_call(
        kernel,
        out_shape=jax.ShapeDtypeStruct((T * B, O), jnp.float32),
        grid_spec=pltpu.PrefetchScalarGridSpec(
            num_scalar_prefetch=0,
            grid=(1,),  # everything fits in VMEM; single step, no pipeline overhead
            in_specs=[
                pl.BlockSpec((T * B, N), lambda i: (0, 0)),  # all timesteps resident
                pl.BlockSpec((N, H), lambda i: (0, 0)),      # fc1 weights (resident)
                pl.BlockSpec((H, O), lambda i: (0, 0)),      # fc_out weights (resident)
            ],
            out_specs=pl.BlockSpec((T * B, O), lambda i: (0, 0)),  # single writeback
            scratch_shapes=[
                pltpu.VMEM((T * B, H), jnp.float32),  # cur1 for all timesteps
                pltpu.VMEM((T * B, H), jnp.float32),  # spk1 for all timesteps
            ],
        ),
        compiler_params=pltpu.CompilerParams(
            dimension_semantics=("arbitrary",),
        ),
    )(x_flat, w1t, w2t)

    return out_flat.reshape(T, B, O)


def snn2_reference(x, w1, w2):
    """Pure-JAX reference of the same recurrence (for a correctness check)."""
    T, B, N = x.shape
    H = w1.shape[0]
    O = w2.shape[0]
    mem1 = jnp.zeros((B, H), jnp.float32)
    mem2 = jnp.zeros((B, O), jnp.float32)
    outs = []
    for t in range(T):
        cur1 = x[t] @ w1.T
        reset1 = (mem1 > THRESHOLD).astype(jnp.float32)
        base1 = BETA * mem1 + cur1
        mem1 = base1 - reset1 * base1
        spk1 = (mem1 > THRESHOLD).astype(jnp.float32)
        cur2 = spk1 @ w2.T
        mem2 = BETA * mem2 + cur2
        outs.append(mem2)
    return jnp.stack(outs)


if __name__ == "__main__":
    # Small, deterministic shapes consistent with the module's forward
    T, B = 8, 2
    INPUT, HIDDEN, OUT = 32, 32, 2

    key = jax.random.PRNGKey(0)
    kx, k1, k2 = jax.random.split(key, 3)

    # PyTorch nn.Linear default init: U(-1/sqrt(fan_in), 1/sqrt(fan_in))
    bound1 = 1.0 / (INPUT ** 0.5)
    bound2 = 1.0 / (HIDDEN ** 0.5)
    w1 = jax.random.uniform(k1, (HIDDEN, INPUT), jnp.float32, -bound1, bound1)
    w2 = jax.random.uniform(k2, (OUT, HIDDEN), jnp.float32, -bound2, bound2)

    # Scale inputs so some neurons actually cross threshold and spike.
    x = 2.0 * jax.random.uniform(kx, (T, B, INPUT), jnp.float32)

    # Transpose weights ONCE, outside the kernel wrapper (avoids per-call transpose).
    w1t = jnp.asarray(w1.T)  # (INPUT, HIDDEN)
    w2t = jnp.asarray(w2.T)  # (HIDDEN, OUT)

    out = snn2_forward(x, w1t, w2t)
    out = jax.block_until_ready(out)

    ref = snn2_reference(x, w1, w2)
    assert out.shape == (T, B, OUT)
    assert jnp.allclose(out, ref, atol=1e-5, rtol=1e-5), "Pallas kernel mismatch vs reference"

    print("KERNEL_OK")
</pallas_src>

<mosaic_0001>
module attributes {stable_mosaic.version = 11 : i64} {
  func.func @kernel(%arg0: i32, %arg1: memref<16x32xf32, #tpu.memory_space<vmem>>, %arg2: memref<32x32xf32, #tpu.memory_space<vmem>>, %arg3: memref<32x2xf32, #tpu.memory_space<vmem>>, %arg4: memref<16x2xf32, #tpu.memory_space<vmem>>, %arg5: memref<16x32xf32, #tpu.memory_space<vmem>>, %arg6: memref<16x32xf32, #tpu.memory_space<vmem>>) attributes {dimension_semantics = [#tpu.dimension_semantics<arbitrary>], iteration_bounds = array<i64: 1>, scalar_prefetch = 0 : i64, scratch_operands = 2 : i64, tpu.core_type = #tpu.core_type<tc>, window_params = [{pipeline_mode = #tpu.pipeline_mode<synchronous>, transform_indices = @transform_0, window_bounds = array<i64: 16, 32>}, {pipeline_mode = #tpu.pipeline_mode<synchronous>, transform_indices = @transform_1, window_bounds = array<i64: 32, 32>}, {pipeline_mode = #tpu.pipeline_mode<synchronous>, transform_indices = @transform_2, window_bounds = array<i64: 32, 2>}, {pipeline_mode = #tpu.pipeline_mode<synchronous>, transform_indices = @transform_3, window_bounds = array<i64: 16, 2>}]} {
    %c0 = arith.constant 0 : index
    %c0_0 = arith.constant 0 : index
    %0 = vector.load %arg1[%c0, %c0_0] : memref<16x32xf32, #tpu.memory_space<vmem>>, vector<16x32xf32>
    %c0_1 = arith.constant 0 : index
    %c0_2 = arith.constant 0 : index
    %1 = vector.load %arg2[%c0_1, %c0_2] : memref<32x32xf32, #tpu.memory_space<vmem>>, vector<32x32xf32>
    %cst = arith.constant dense<0.000000e+00> : vector<16x32xf32>
    %2 = tpu.matmul %0, %1, %cst {dimension_numbers = #tpu.dot_dimension_numbers<[1], [0], [0], [1], [0, 0, 1, 1], [], []>} : vector<16x32xf32>, vector<32x32xf32>, vector<16x32xf32> -> vector<16x32xf32>
    %c0_3 = arith.constant 0 : index
    %c0_4 = arith.constant 0 : index
    %3 = vector.load %arg5[%c0_3, %c0_4] : memref<16x32xf32, #tpu.memory_space<vmem>>, vector<16x32xf32>
    tpu.vector_store %arg5[%c0_3, %c0_4], %2 {strides = array<i32>} : memref<16x32xf32, #tpu.memory_space<vmem>>, vector<16x32xf32>,
    %cst_5 = arith.constant 0.000000e+00 : f32
    %4 = vector.broadcast %cst_5 : f32 to vector<2x32xf32>
    %c0_6 = arith.constant 0 : index
    %c0_7 = arith.constant 0 : index
    %5 = vector.load %arg5[%c0_6, %c0_7] : memref<16x32xf32, #tpu.memory_space<vmem>>, vector<2x32xf32>
    %cst_8 = arith.constant 0.959999978 : f32
    %6 = vector.broadcast %cst_8 : f32 to vector<2x32xf32>
    %7 = arith.mulf %6, %4 : vector<2x32xf32>
    %8 = arith.addf %7, %5 : vector<2x32xf32>
    %cst_9 = arith.constant 1.000000e+00 : f32
    %9 = vector.broadcast %cst_9 : f32 to vector<2x32xf32>
    %10 = arith.cmpf ogt, %4, %9 : vector<2x32xf32>
    %cst_10 = arith.constant 0.000000e+00 : f32
    %11 = vector.broadcast %cst_10 : f32 to vector<2x32xf32>
    %12 = arith.select %10, %11, %8 : vector<2x32xi1>, vector<2x32xf32>
    %cst_11 = arith.constant 1.000000e+00 : f32
    %13 = vector.broadcast %cst_11 : f32 to vector<2x32xf32>
    %14 = arith.cmpf ogt, %12, %13 : vector<2x32xf32>
    %15 = arith.extui %14 : vector<2x32xi1> to vector<2x32xi32>
    %16 = arith.sitofp %15 : vector<2x32xi32> to vector<2x32xf32>
    %c0_12 = arith.constant 0 : index
    %c0_13 = arith.constant 0 : index
    %17 = vector.load %arg6[%c0_12, %c0_13] : memref<16x32xf32, #tpu.memory_space<vmem>>, vector<2x32xf32>
    tpu.vector_store %arg6[%c0_12, %c0_13], %16 {strides = array<i32>} : memref<16x32xf32, #tpu.memory_space<vmem>>, vector<2x32xf32>,
    %c2 = arith.constant 2 : index
    %c0_14 = arith.constant 0 : index
    %18 = vector.load %arg5[%c2, %c0_14] : memref<16x32xf32, #tpu.memory_space<vmem>>, vector<2x32xf32>
    %cst_15 = arith.constant 0.959999978 : f32
    %19 = vector.broadcast %cst_15 : f32 to vector<2x32xf32>
    %20 = arith.mulf %19, %12 : vector<2x32xf32>
    %21 = arith.addf %20, %18 : vector<2x32xf32>
    %cst_16 = arith.constant 1.000000e+00 : f32
    %22 = vector.broadcast %cst_16 : f32 to vector<2x32xf32>
    %23 = arith.cmpf ogt, %12, %22 : vector<2x32xf32>
    %cst_17 = arith.constant 0.000000e+00 : f32
    %24 = vector.broadcast %cst_17 : f32 to vector<2x32xf32>
    %25 = arith.select %23, %24, %21 : vector<2x32xi1>, vector<2x32xf32>
    %cst_18 = arith.constant 1.000000e+00 : f32
    %26 = vector.broadcast %cst_18 : f32 to vector<2x32xf32>
    %27 = arith.cmpf ogt, %25, %26 : vector<2x32xf32>
    %28 = arith.extui %27 : vector<2x32xi1> to vector<2x32xi32>
    %29 = arith.sitofp %28 : vector<2x32xi32> to vector<2x32xf32>
    %c2_19 = arith.constant 2 : index
    %c0_20 = arith.constant 0 : index
    %30 = vector.load %arg6[%c2_19, %c0_20] : memref<16x32xf32, #tpu.memory_space<vmem>>, vector<2x32xf32>
    tpu.vector_store %arg6[%c2_19, %c0_20], %29 {strides = array<i32>} : memref<16x32xf32, #tpu.memory_space<vmem>>, vector<2x32xf32>,
    %c4 = arith.constant 4 : index
    %c0_21 = arith.constant 0 : index
    %31 = vector.load %arg5[%c4, %c0_21] : memref<16x32xf32, #tpu.memory_space<vmem>>, vector<2x32xf32>
    %cst_22 = arith.constant 0.959999978 : f32
    %32 = vector.broadcast %cst_22 : f32 to vector<2x32xf32>
    %33 = arith.mulf %32, %25 : vector<2x32xf32>
    %34 = arith.addf %33, %31 : vector<2x32xf32>
    %cst_23 = arith.constant 1.000000e+00 : f32
    %35 = vector.broadcast %cst_23 : f32 to vector<2x32xf32>
    %36 = arith.cmpf ogt, %25, %35 : vector<2x32xf32>
    %cst_24 = arith.constant 0.000000e+00 : f32
    %37 = vector.broadcast %cst_24 : f32 to vector<2x32xf32>
    %38 = arith.select %36, %37, %34 : vector<2x32xi1>, vector<2x32xf32>
    %cst_25 = arith.constant 1.000000e+00 : f32
    %39 = vector.broadcast %cst_25 : f32 to vector<2x32xf32>
    %40 = arith.cmpf ogt, %38, %39 : vector<2x32xf32>
    %41 = arith.extui %40 : vector<2x32xi1> to vector<2x32xi32>
    %42 = arith.sitofp %41 : vector<2x32xi32> to vector<2x32xf32>
    %c4_26 = arith.constant 4 : index
    %c0_27 = arith.constant 0 : index
    %43 = vector.load %arg6[%c4_26, %c0_27] : memref<16x32xf32, #tpu.memory_space<vmem>>, vector<2x32xf32>
    tpu.vector_store %arg6[%c4_26, %c0_27], %42 {strides = array<i32>} : memref<16x32xf32, #tpu.memory_space<vmem>>, vector<2x32xf32>,
    %c6 = arith.constant 6 : index
    %c0_28 = arith.constant 0 : index
    %44 = vector.load %arg5[%c6, %c0_28] : memref<16x32xf32, #tpu.memory_space<vmem>>, vector<2x32xf32>
    %cst_29 = arith.constant 0.959999978 : f32
    %45 = vector.broadcast %cst_29 : f32 to vector<2x32xf32>
    %46 = arith.mulf %45, %38 : vector<2x32xf32>
    %47 = arith.addf %46, %44 : vector<2x32xf32>
    %cst_30 = arith.constant 1.000000e+00 : f32
    %48 = vector.broadcast %cst_30 : f32 to vector<2x32xf32>
    %49 = arith.cmpf ogt, %38, %48 : vector<2x32xf32>
    %cst_31 = arith.constant 0.000000e+00 : f32
    %50 = vector.broadcast %cst_31 : f32 to vector<2x32xf32>
    %51 = arith.select %49, %50, %47 : vector<2x32xi1>, vector<2x32xf32>
    %cst_32 = arith.constant 1.000000e+00 : f32
    %52 = vector.broadcast %cst_32 : f32 to vector<2x32xf32>
    %53 = arith.cmpf ogt, %51, %52 : vector<2x32xf32>
    %54 = arith.extui %53 : vector<2x32xi1> to vector<2x32xi32>
    %55 = arith.sitofp %54 : vector<2x32xi32> to vector<2x32xf32>
    %c6_33 = arith.constant 6 : index
    %c0_34 = arith.constant 0 : index
    %56 = vector.load %arg6[%c6_33, %c0_34] : memref<16x32xf32, #tpu.memory_space<vmem>>, vector<2x32xf32>
    tpu.vector_store %arg6[%c6_33, %c0_34], %55 {strides = array<i32>} : memref<16x32xf32, #tpu.memory_space<vmem>>, vector<2x32xf32>,
    %c8 = arith.constant 8 : index
    %c0_35 = arith.constant 0 : index
    %57 = vector.load %arg5[%c8, %c0_35] : memref<16x32xf32, #tpu.memory_space<vmem>>, vector<2x32xf32>
    %cst_36 = arith.constant 0.959999978 : f32
    %58 = vector.broadcast %cst_36 : f32 to vector<2x32xf32>
    %59 = arith.mulf %58, %51 : vector<2x32xf32>
    %60 = arith.addf %59, %57 : vector<2x32xf32>
    %cst_37 = arith.constant 1.000000e+00 : f32
    %61 = vector.broadcast %cst_37 : f32 to vector<2x32xf32>
    %62 = arith.cmpf ogt, %51, %61 : vector<2x32xf32>
    %cst_38 = arith.constant 0.000000e+00 : f32
    %63 = vector.broadcast %cst_38 : f32 to vector<2x32xf32>
    %64 = arith.select %62, %63, %60 : vector<2x32xi1>, vector<2x32xf32>
    %cst_39 = arith.constant 1.000000e+00 : f32
    %65 = vector.broadcast %cst_39 : f32 to vector<2x32xf32>
    %66 = arith.cmpf ogt, %64, %65 : vector<2x32xf32>
    %67 = arith.extui %66 : vector<2x32xi1> to vector<2x32xi32>
    %68 = arith.sitofp %67 : vector<2x32xi32> to vector<2x32xf32>
    %c8_40 = arith.constant 8 : index
    %c0_41 = arith.constant 0 : index
    %69 = vector.load %arg6[%c8_40, %c0_41] : memref<16x32xf32, #tpu.memory_space<vmem>>, vector<2x32xf32>
    tpu.vector_store %arg6[%c8_40, %c0_41], %68 {strides = array<i32>} : memref<16x32xf32, #tpu.memory_space<vmem>>, vector<2x32xf32>,
    %c10 = arith.constant 10 : index
    %c0_42 = arith.constant 0 : index
    %70 = vector.load %arg5[%c10, %c0_42] : memref<16x32xf32, #tpu.memory_space<vmem>>, vector<2x32xf32>
    %cst_43 = arith.constant 0.959999978 : f32
    %71 = vector.broadcast %cst_43 : f32 to vector<2x32xf32>
    %72 = arith.mulf %71, %64 : vector<2x32xf32>
    %73 = arith.addf %72, %70 : vector<2x32xf32>
    %cst_44 = arith.constant 1.000000e+00 : f32
    %74 = vector.broadcast %cst_44 : f32 to vector<2x32xf32>
    %75 = arith.cmpf ogt, %64, %74 : vector<2x32xf32>
    %cst_45 = arith.constant 0.000000e+00 : f32
    %76 = vector.broadcast %cst_45 : f32 to vector<2x32xf32>
    %77 = arith.select %75, %76, %73 : vector<2x32xi1>, vector<2x32xf32>
    %cst_46 = arith.constant 1.000000e+00 : f32
    %78 = vector.broadcast %cst_46 : f32 to vector<2x32xf32>
    %79 = arith.cmpf ogt, %77, %78 : vector<2x32xf32>
    %80 = arith.extui %79 : vector<2x32xi1> to vector<2x32xi32>
    %81 = arith.sitofp %80 : vector<2x32xi32> to vector<2x32xf32>
    %c10_47 = arith.constant 10 : index
    %c0_48 = arith.constant 0 : index
    %82 = vector.load %arg6[%c10_47, %c0_48] : memref<16x32xf32, #tpu.memory_space<vmem>>, vector<2x32xf32>
    tpu.vector_store %arg6[%c10_47, %c0_48], %81 {strides = array<i32>} : memref<16x32xf32, #tpu.memory_space<vmem>>, vector<2x32xf32>,
    %c12 = arith.constant 12 : index
    %c0_49 = arith.constant 0 : index
    %83 = vector.load %arg5[%c12, %c0_49] : memref<16x32xf32, #tpu.memory_space<vmem>>, vector<2x32xf32>
    %cst_50 = arith.constant 0.959999978 : f32
    %84 = vector.broadcast %cst_50 : f32 to vector<2x32xf32>
    %85 = arith.mulf %84, %77 : vector<2x32xf32>
    %86 = arith.addf %85, %83 : vector<2x32xf32>
    %cst_51 = arith.constant 1.000000e+00 : f32
    %87 = vector.broadcast %cst_51 : f32 to vector<2x32xf32>
    %88 = arith.cmpf ogt, %77, %87 : vector<2x32xf32>
    %cst_52 = arith.constant 0.000000e+00 : f32
    %89 = vector.broadcast %cst_52 : f32 to vector<2x32xf32>
    %90 = arith.select %88, %89, %86 : vector<2x32xi1>, vector<2x32xf32>
    %cst_53 = arith.constant 1.000000e+00 : f32
    %91 = vector.broadcast %cst_53 : f32 to vector<2x32xf32>
    %92 = arith.cmpf ogt, %90, %91 : vector<2x32xf32>
    %93 = arith.extui %92 : vector<2x32xi1> to vector<2x32xi32>
    %94 = arith.sitofp %93 : vector<2x32xi32> to vector<2x32xf32>
    %c12_54 = arith.constant 12 : index
    %c0_55 = arith.constant 0 : index
    %95 = vector.load %arg6[%c12_54, %c0_55] : memref<16x32xf32, #tpu.memory_space<vmem>>, vector<2x32xf32>
    tpu.vector_store %arg6[%c12_54, %c0_55], %94 {strides = array<i32>} : memref<16x32xf32, #tpu.memory_space<vmem>>, vector<2x32xf32>,
    %c14 = arith.constant 14 : index
    %c0_56 = arith.constant 0 : index
    %96 = vector.load %arg5[%c14, %c0_56] : memref<16x32xf32, #tpu.memory_space<vmem>>, vector<2x32xf32>
    %cst_57 = arith.constant 0.959999978 : f32
    %97 = vector.broadcast %cst_57 : f32 to vector<2x32xf32>
    %98 = arith.mulf %97, %90 : vector<2x32xf32>
    %99 = arith.addf %98, %96 : vector<2x32xf32>
    %cst_58 = arith.constant 1.000000e+00 : f32
    %100 = vector.broadcast %cst_58 : f32 to vector<2x32xf32>
    %101 = arith.cmpf ogt, %90, %100 : vector<2x32xf32>
    %cst_59 = arith.constant 0.000000e+00 : f32
    %102 = vector.broadcast %cst_59 : f32 to vector<2x32xf32>
    %103 = arith.select %101, %102, %99 : vector<2x32xi1>, vector<2x32xf32>
    %cst_60 = arith.constant 1.000000e+00 : f32
    %104 = vector.broadcast %cst_60 : f32 to vector<2x32xf32>
    %105 = arith.cmpf ogt, %103, %104 : vector<2x32xf32>
    %106 = arith.extui %105 : vector<2x32xi1> to vector<2x32xi32>
    %107 = arith.sitofp %106 : vector<2x32xi32> to vector<2x32xf32>
    %c14_61 = arith.constant 14 : index
    %c0_62 = arith.constant 0 : index
    %108 = vector.load %arg6[%c14_61, %c0_62] : memref<16x32xf32, #tpu.memory_space<vmem>>, vector<2x32xf32>
    tpu.vector_store %arg6[%c14_61, %c0_62], %107 {strides = array<i32>} : memref<16x32xf32, #tpu.memory_space<vmem>>, vector<2x32xf32>,
    %c0_63 = arith.constant 0 : index
    %c0_64 = arith.constant 0 : index
    %109 = vector.load %arg6[%c0_63, %c0_64] : memref<16x32xf32, #tpu.memory_space<vmem>>, vector<16x32xf32>
    %c0_65 = arith.constant 0 : index
    %c0_66 = arith.constant 0 : index
    %110 = vector.load %arg3[%c0_65, %c0_66] : memref<32x2xf32, #tpu.memory_space<vmem>>, vector<32x2xf32>
    %cst_67 = arith.constant dense<0.000000e+00> : vector<16x2xf32>
    %111 = tpu.matmul %109, %110, %cst_67 {dimension_numbers = #tpu.dot_dimension_numbers<[1], [0], [0], [1], [0, 0, 1, 1], [], []>} : vector<16x32xf32>, vector<32x2xf32>, vector<16x2xf32> -> vector<16x2xf32>
    %c0_68 = arith.constant 0 : index
    %c0_69 = arith.constant 0 : index
    %112 = vector.load %arg4[%c0_68, %c0_69] : memref<16x2xf32, #tpu.memory_space<vmem>>, vector<16x2xf32>
    tpu.vector_store %arg4[%c0_68, %c0_69], %111 {strides = array<i32>} : memref<16x2xf32, #tpu.memory_space<vmem>>, vector<16x2xf32>,
    %c0_70 = arith.constant 0 : index
    %c0_71 = arith.constant 0 : index
    %113 = vector.load %arg4[%c0_70, %c0_71] : memref<16x2xf32, #tpu.memory_space<vmem>>, vector<2x2xf32>
    %cst_72 = arith.constant 0.959999978 : f32
    %114 = vector.broadcast %cst_72 : f32 to vector<2x2xf32>
    %115 = arith.mulf %114, %113 : vector<2x2xf32>
    %c2_73 = arith.constant 2 : index
    %c0_74 = arith.constant 0 : index
    %116 = vector.load %arg4[%c2_73, %c0_74] : memref<16x2xf32, #tpu.memory_space<vmem>>, vector<2x2xf32>
    %117 = arith.addf %115, %116 : vector<2x2xf32>
    %c2_75 = arith.constant 2 : index
    %c0_76 = arith.constant 0 : index
    %118 = vector.load %arg4[%c2_75, %c0_76] : memref<16x2xf32, #tpu.memory_space<vmem>>, vector<2x2xf32>
    tpu.vector_store %arg4[%c2_75, %c0_76], %117 {strides = array<i32>} : memref<16x2xf32, #tpu.memory_space<vmem>>, vector<2x2xf32>,
    %c2_77 = arith.constant 2 : index
    %c0_78 = arith.constant 0 : index
    %119 = vector.load %arg4[%c2_77, %c0_78] : memref<16x2xf32, #tpu.memory_space<vmem>>, vector<2x2xf32>
    %cst_79 = arith.constant 0.959999978 : f32
    %120 = vector.broadcast %cst_79 : f32 to vector<2x2xf32>
    %121 = arith.mulf %120, %119 : vector<2x2xf32>
    %c4_80 = arith.constant 4 : index
    %c0_81 = arith.constant 0 : index
    %122 = vector.load %arg4[%c4_80, %c0_81] : memref<16x2xf32, #tpu.memory_space<vmem>>, vector<2x2xf32>
    %123 = arith.addf %121, %122 : vector<2x2xf32>
    %c4_82 = arith.constant 4 : index
    %c0_83 = arith.constant 0 : index
    %124 = vector.load %arg4[%c4_82, %c0_83] : memref<16x2xf32, #tpu.memory_space<vmem>>, vector<2x2xf32>
    tpu.vector_store %arg4[%c4_82, %c0_83], %123 {strides = array<i32>} : memref<16x2xf32, #tpu.memory_space<vmem>>, vector<2x2xf32>,
    %c4_84 = arith.constant 4 : index
    %c0_85 = arith.constant 0 : index
    %125 = vector.load %arg4[%c4_84, %c0_85] : memref<16x2xf32, #tpu.memory_space<vmem>>, vector<2x2xf32>
    %cst_86 = arith.constant 0.959999978 : f32
    %126 = vector.broadcast %cst_86 : f32 to vector<2x2xf32>
    %127 = arith.mulf %126, %125 : vector<2x2xf32>
    %c6_87 = arith.constant 6 : index
    %c0_88 = arith.constant 0 : index
    %128 = vector.load %arg4[%c6_87, %c0_88] : memref<16x2xf32, #tpu.memory_space<vmem>>, vector<2x2xf32>
    %129 = arith.addf %127, %128 : vector<2x2xf32>
    %c6_89 = arith.constant 6 : index
    %c0_90 = arith.constant 0 : index
    %130 = vector.load %arg4[%c6_89, %c0_90] : memref<16x2xf32, #tpu.memory_space<vmem>>, vector<2x2xf32>
    tpu.vector_store %arg4[%c6_89, %c0_90], %129 {strides = array<i32>} : memref<16x2xf32, #tpu.memory_space<vmem>>, vector<2x2xf32>,
    %c6_91 = arith.constant 6 : index
    %c0_92 = arith.constant 0 : index
    %131 = vector.load %arg4[%c6_91, %c0_92] : memref<16x2xf32, #tpu.memory_space<vmem>>, vector<2x2xf32>
    %cst_93 = arith.constant 0.959999978 : f32
    %132 = vector.broadcast %cst_93 : f32 to vector<2x2xf32>
    %133 = arith.mulf %132, %131 : vector<2x2xf32>
    %c8_94 = arith.constant 8 : index
    %c0_95 = arith.constant 0 : index
    %134 = vector.load %arg4[%c8_94, %c0_95] : memref<16x2xf32, #tpu.memory_space<vmem>>, vector<2x2xf32>
    %135 = arith.addf %133, %134 : vector<2x2xf32>
    %c8_96 = arith.constant 8 : index
    %c0_97 = arith.constant 0 : index
    %136 = vector.load %arg4[%c8_96, %c0_97] : memref<16x2xf32, #tpu.memory_space<vmem>>, vector<2x2xf32>
    tpu.vector_store %arg4[%c8_96, %c0_97], %135 {strides = array<i32>} : memref<16x2xf32, #tpu.memory_space<vmem>>, vector<2x2xf32>,
    %c8_98 = arith.constant 8 : index
    %c0_99 = arith.constant 0 : index
    %137 = vector.load %arg4[%c8_98, %c0_99] : memref<16x2xf32, #tpu.memory_space<vmem>>, vector<2x2xf32>
    %cst_100 = arith.constant 0.959999978 : f32
    %138 = vector.broadcast %cst_100 : f32 to vector<2x2xf32>
    %139 = arith.mulf %138, %137 : vector<2x2xf32>
    %c10_101 = arith.constant 10 : index
    %c0_102 = arith.constant 0 : index
    %140 = vector.load %arg4[%c10_101, %c0_102] : memref<16x2xf32, #tpu.memory_space<vmem>>, vector<2x2xf32>
    %141 = arith.addf %139, %140 : vector<2x2xf32>
    %c10_103 = arith.constant 10 : index
    %c0_104 = arith.constant 0 : index
    %142 = vector.load %arg4[%c10_103, %c0_104] : memref<16x2xf32, #tpu.memory_space<vmem>>, vector<2x2xf32>
    tpu.vector_store %arg4[%c10_103, %c0_104], %141 {strides = array<i32>} : memref<16x2xf32, #tpu.memory_space<vmem>>, vector<2x2xf32>,
    %c10_105 = arith.constant 10 : index
    %c0_106 = arith.constant 0 : index
    %143 = vector.load %arg4[%c10_105, %c0_106] : memref<16x2xf32, #tpu.memory_space<vmem>>, vector<2x2xf32>
    %cst_107 = arith.constant 0.959999978 : f32
    %144 = vector.broadcast %cst_107 : f32 to vector<2x2xf32>
    %145 = arith.mulf %144, %143 : vector<2x2xf32>
    %c12_108 = arith.constant 12 : index
    %c0_109 = arith.constant 0 : index
    %146 = vector.load %arg4[%c12_108, %c0_109] : memref<16x2xf32, #tpu.memory_space<vmem>>, vector<2x2xf32>
    %147 = arith.addf %145, %146 : vector<2x2xf32>
    %c12_110 = arith.constant 12 : index
    %c0_111 = arith.constant 0 : index
    %148 = vector.load %arg4[%c12_110, %c0_111] : memref<16x2xf32, #tpu.memory_space<vmem>>, vector<2x2xf32>
    tpu.vector_store %arg4[%c12_110, %c0_111], %147 {strides = array<i32>} : memref<16x2xf32, #tpu.memory_space<vmem>>, vector<2x2xf32>,
    %c12_112 = arith.constant 12 : index
    %c0_113 = arith.constant 0 : index
    %149 = vector.load %arg4[%c12_112, %c0_113] : memref<16x2xf32, #tpu.memory_space<vmem>>, vector<2x2xf32>
    %cst_114 = arith.constant 0.959999978 : f32
    %150 = vector.broadcast %cst_114 : f32 to vector<2x2xf32>
    %151 = arith.mulf %150, %149 : vector<2x2xf32>
    %c14_115 = arith.constant 14 : index
    %c0_116 = arith.constant 0 : index
    %152 = vector.load %arg4[%c14_115, %c0_116] : memref<16x2xf32, #tpu.memory_space<vmem>>, vector<2x2xf32>
    %153 = arith.addf %151, %152 : vector<2x2xf32>
    %c14_117 = arith.constant 14 : index
    %c0_118 = arith.constant 0 : index
    %154 = vector.load %arg4[%c14_117, %c0_118] : memref<16x2xf32, #tpu.memory_space<vmem>>, vector<2x2xf32>
    tpu.vector_store %arg4[%c14_117, %c0_118], %153 {strides = array<i32>} : memref<16x2xf32, #tpu.memory_space<vmem>>, vector<2x2xf32>,
    return
  }
  func.func @transform_0(%arg0: i32) -> (i32, i32) {
    %c0_i32 = arith.constant 0 : i32
    %c0_i32_0 = arith.constant 0 : i32
    %c0_i32_1 = arith.constant 0 : i32
    return %c0_i32, %c0_i32_0 : i32, i32
  }
  func.func @transform_1(%arg0: i32) -> (i32, i32) {
    %c0_i32 = arith.constant 0 : i32
    %c0_i32_0 = arith.constant 0 : i32
    %c0_i32_1 = arith.constant 0 : i32
    return %c0_i32, %c0_i32_0 : i32, i32
  }
  func.func @transform_2(%arg0: i32) -> (i32, i32) {
    %c0_i32 = arith.constant 0 : i32
    %c0_i32_0 = arith.constant 0 : i32
    %c0_i32_1 = arith.constant 0 : i32
    return %c0_i32, %c0_i32_0 : i32, i32
  }
  func.func @transform_3(%arg0: i32) -> (i32, i32) {
    %c0_i32 = arith.constant 0 : i32
    %c0_i32_0 = arith.constant 0 : i32
    %c0_i32_1 = arith.constant 0 : i32
    return %c0_i32, %c0_i32_0 : i32, i32
  }
}

</mosaic_0001>

<llo_original>
// kernel: tpu_custom_call.1
$region0: #{tpu_custom_call.1}
  #allocation0 [shape = 'u32[]', space=smem, size = 0x4, offset = 0x4, fixed_abs, tag = 'smem constant byte address 0x4 - core index']
  #allocation1 [shape = 'u32[144,128]{1,0:T(1,128)}', space=vmem, size = 0x12000, scoped, tag = 'internal scratch']
  #allocation2 [shape = 'f32[16,32]{1,0:T(8,128)}', space=vmem, size = 0x2000, scoped, tag = 'scratch operand']
  #allocation3 [shape = 'f32[16,32]{1,0:T(8,128)}', space=vmem, size = 0x2000, scoped, tag = 'scratch operand']
  %s0 = inlined_call_operand.hbm [shape: f32[16,32], index: 0, kind: input, shape index: {}]
  %s1 = inlined_call_operand.vmem [shape: f32[32,32], index: 1, kind: input, shape index: {}]
  %s2 = inlined_call_operand.vmem [shape: f32[32,2], index: 2, kind: input, shape index: {}]
  %s3 = inlined_call_operand.vmem [shape: f32[16,2], index: 3, kind: output, shape index: {}]
  %s4 = sld [smem:[#allocation0]]
  $region26: #{tpu_custom_call.1} parent=0
    _
  %s6 = ssub.s32 1, %s4
  %s7 = scalar_select 0, %s6, %s4
  $region1: #{tpu_custom_call.1} parent=0
    #allocation4 [shape = 'u8[8192]{0}', space=vmem, size = 0x2000, scoped, tag = 'input window, operand 0, single buffered']
    #allocation5 [shape = 's32[1]{0}', space=sflag, size = 0x4, scoped, tag = 'scoped memory for tpu_custom_call.1']
    %8 = vsyncpa [#allocation5], 0
    // Predicated region
    $region2: #{tpu_custom_call.1} parent=1 // pred_check
      _
    $region3: #{tpu_custom_call.1} parent=1 // pred_check_branch
      %10 = sbr.rel (0) target = $region5
    $region4: #{tpu_custom_call.1} parent=1 // pred_region
      %s12 = ssub.s32 256, 256
      %13 = vsyncadd [#allocation5], %s12
      %s14 = sshll.u32 [#allocation4], 4
      %s15 = int_to_ptr.vmem [resolvable:$true] %s14
      %20 = dma.hbm_to_vmem [thread:$0]  %s0, 256, %s15, [#allocation5], 128, 128, 8
    $region5: #{tpu_custom_call.1} parent=1 // pred_fallthru
      _
    // Predicated region
    $region6: #{tpu_custom_call.1} parent=1 // pred_check
      _
    $region7: #{tpu_custom_call.1} parent=1 // pred_check_branch
      %22 = sbr.rel (0) target = $region9
    $region8: #{tpu_custom_call.1} parent=1 // pred_region
      _
    $region9: #{tpu_custom_call.1} parent=1 // pred_fallthru
      _
    // Predicated region
    $region10: #{tpu_custom_call.1} parent=1 // pred_check
      _
    $region11: #{tpu_custom_call.1} parent=1 // pred_check_branch
      %24 = sbr.rel (0) target = $region13
    $region12: #{tpu_custom_call.1} parent=1 // pred_region
      _
    $region13: #{tpu_custom_call.1} parent=1 // pred_fallthru
      _
    // Predicated region
    $region14: #{tpu_custom_call.1} parent=1 // pred_check
      _
    $region15: #{tpu_custom_call.1} parent=1 // pred_check_branch
      %26 = sbr.rel (0) target = $region17
    $region16: #{tpu_custom_call.1} parent=1 // pred_region
      %27 = dma.done [#allocation5], 256
    $region17: #{tpu_custom_call.1} parent=1 // pred_fallthru
      _
    %v28 = vld [vmem:[#allocation4] sm:$0xff]
    %v29 = vld [vmem:[#allocation4 + $0x8] sm:$0xff]
    %v30 = vld [vmem:[%s1] sm:$0xff]
    %v31 = vld [vmem:[%s1 + $0x8] sm:$0xff]
    %v32 = vld [vmem:[%s1 + $0x10] sm:$0xff]
    %v33 = vld [vmem:[%s1 + $0x18] sm:$0xff]
    %vm34 = vcmask 261120
    %v36 = vsel %vm34, %v28, 0
    %v39 = vsel %vm34, %v29, 0
    %41 = vmatprep.subr.mxu0 0.0
    %42 = vmatpush1.msra.mxu0 %v30
    %43 = vmatprep.subr.mxu0 0.0
    %44 = vmatpush1.msra.mxu0 %v31
    %45 = vmatprep.subr.mxu0 0.0
    %46 = vmatpush1.msra.mxu0 %v32
    %47 = vmatprep.subr.mxu0 0.0
    %48 = vmatpush1.msra.mxu0 %v33
    %49 = vmatprep.subr.mxu0 0.0
    %50 = vmatpush1.msra.mxu0 0.0
    %51 = vmatprep.subr.mxu0 0.0
    %52 = vmatpush1.msra.mxu0 0.0
    %53 = vmatprep.subr.mxu0 0.0
    %54 = vmatpush1.msra.mxu0 0.0
    %55 = vmatprep.subr.mxu0 0.0
    %56 = vmatpush1.msra.mxu0 0.0
    %57 = vmatprep.subr.mxu0 0.0
    %58 = vmatpush1.msra.mxu0 0.0
    %59 = vmatprep.subr.mxu0 0.0
    %60 = vmatpush1.msra.mxu0 0.0
    %61 = vmatprep.subr.mxu0 0.0
    %62 = vmatpush1.msra.mxu0 0.0
    %63 = vmatprep.subr.mxu0 0.0
    %64 = vmatpush1.msra.mxu0 0.0
    %65 = vmatprep.subr.mxu0 0.0
    %66 = vmatpush1.msra.mxu0 0.0
    %67 = vmatprep.subr.mxu0 0.0
    %68 = vmatpush1.msra.mxu0 0.0
    %69 = vmatprep.subr.mxu0 0.0
    %70 = vmatpush1.msra.mxu0 0.0
    %71 = vmatprep.subr.mxu0 0.0
    %72 = vmatpush1.msra.mxu0 0.0
    %73 = vmatprep.subr.mxu0 0.0
    %74 = vmatpush1.msra.mxu0 0.0
    %75 = vmatprep.subr.mxu0 0.0
    %76 = vmatpush1.msra.mxu0 0.0
    %77 = vmatprep.subr.mxu0 0.0
    %78 = vmatpush1.msra.mxu0 0.0
    %79 = vmatprep.subr.mxu0 0.0
    %80 = vmatpush1.msra.mxu0 0.0
    %81 = vmatprep.subr.mxu0 0.0
    %82 = vmatpush1.msra.mxu0 0.0
    %83 = vmatprep.subr.mxu0 0.0
    %84 = vmatpush1.msra.mxu0 0.0
    %85 = vmatprep.subr.mxu0 0.0
    %86 = vmatpush1.msra.mxu0 0.0
    %87 = vmatprep.subr.mxu0 0.0
    %88 = vmatpush1.msra.mxu0 0.0
    %89 = vmatprep.subr.mxu0 0.0
    %90 = vmatpush1.msra.mxu0 0.0
    %91 = vmatprep.subr.mxu0 0.0
    %92 = vmatpush1.msra.mxu0 0.0
    %93 = vmatprep.subr.mxu0 0.0
    %94 = vmatpush1.msra.mxu0 0.0
    %95 = vmatprep.subr.mxu0 0.0
    %96 = vmatpush1.msra.mxu0 0.0
    %97 = vmatprep.subr.mxu0 0.0
    %98 = vmatpush1.msra.mxu0 0.0
    %99 = vmatprep.subr.mxu0 0.0
    %100 = vmatpush1.msra.mxu0 0.0
    %101 = vmatprep.subr.mxu0 0.0
    %102 = vmatpush1.msra.mxu0 0.0
    %103 = vmatprep.subr.mxu0 0.0
    %104 = vmatpush1.msra.mxu0 0.0
    %105 = vmatprep.mubr.f32.mxu0 0.0
    %106 = vmatmul.mubr.f32.gmra.mrb[0].mxu0 %v36
    %v107 = vpop.f32.mrb[0].mxu0
    %v108 = vadd.f32 0.0, %v107
    %v109 = vpop.f32.mrb[0].mxu0
    %110 = vmatprep.mubr.f32.mxu0 0.0
    %111 = vmatmul.mubr.f32.gmra.mrb[0].mxu0 %v39
    %v112 = vpop.f32.mrb[0].mxu0
    %v113 = vadd.f32 0.0, %v112
    %v114 = vpop.f32.mrb[0].mxu0
    %115 = vdwg.mxu0
    %116 = vst.msk [vmem:[#allocation2] sm:$0xff] %vm34, %v108
    %117 = vst.msk [vmem:[#allocation2 + $0x8] sm:$0xff] %vm34, %v113
    %v118 = vld [vmem:[#allocation2] sm:$0x3]
    %v119 = vadd.f32 %v118, 0.0
    %vm120 = vcmp.gt.f32.partialorder 0.0, 1.0
    %v121 = vsel %vm120, 0.0, %v119
    %vm122 = vcmp.gt.f32.partialorder %v121, 1.0
    %v123 = vsel %vm122, 1, 0
    %v124 = vcvt.s32.f32 %v123
    %vm125 = vcmask 254976
    %126 = vst.msk [vmem:[#allocation3] sm:$0x3] %vm125, %v124
    %v127 = vld [vmem:[#allocation2 + $0x2] sm:$0x3]
    %v128 = vmul.f32 %v121, 0.96
    %v129 = vadd.f32 %v128, %v127
    %v130 = vsel %vm122, 0.0, %v129
    %vm131 = vcmp.gt.f32.partialorder %v130, 1.0
    %v132 = vsel %vm131, 1, 0
    %v133 = vcvt.s32.f32 %v132
    %134 = vst.msk [vmem:[#allocation3 + $0x2] sm:$0x3] %vm125, %v133
    %v135 = vld [vmem:[#allocation2 + $0x4] sm:$0x3]
    %v136 = vmul.f32 %v130, 0.96
    %v137 = vadd.f32 %v136, %v135
    %v138 = vsel %vm131, 0.0, %v137
    %vm139 = vcmp.gt.f32.partialorder %v138, 1.0
    %v140 = vsel %vm139, 1, 0
    %v141 = vcvt.s32.f32 %v140
    %142 = vst.msk [vmem:[#allocation3 + $0x4] sm:$0x3] %vm125, %v141
    %v143 = vld [vmem:[#allocation2 + $0x6] sm:$0x3]
    %v144 = vmul.f32 %v138, 0.96
    %v145 = vadd.f32 %v144, %v143
    %v146 = vsel %vm139, 0.0, %v145
    %vm147 = vcmp.gt.f32.partialorder %v146, 1.0
    %v148 = vsel %vm147, 1, 0
    %v149 = vcvt.s32.f32 %v148
    %150 = vst.msk [vmem:[#allocation3 + $0x6] sm:$0x3] %vm125, %v149
    %v151 = vld [vmem:[#allocation2 + $0x8] sm:$0x3]
    %v152 = vmul.f32 %v146, 0.96
    %v153 = vadd.f32 %v152, %v151
    %v154 = vsel %vm147, 0.0, %v153
    %vm155 = vcmp.gt.f32.partialorder %v154, 1.0
    %v156 = vsel %vm155, 1, 0
    %v157 = vcvt.s32.f32 %v156
    %158 = vst.msk [vmem:[#allocation3 + $0x8] sm:$0x3] %vm125, %v157
    %v159 = vld [vmem:[#allocation2 + $0xa] sm:$0x3]
    %v160 = vmul.f32 %v154, 0.96
    %v161 = vadd.f32 %v160, %v159
    %v162 = vsel %vm155, 0.0, %v161
    %vm163 = vcmp.gt.f32.partialorder %v162, 1.0
    %v164 = vsel %vm163, 1, 0
    %v165 = vcvt.s32.f32 %v164
    %166 = vst.msk [vmem:[#allocation3 + $0xa] sm:$0x3] %vm125, %v165
    %v167 = vld [vmem:[#allocation2 + $0xc] sm:$0x3]
    %v168 = vmul.f32 %v162, 0.96
    %v169 = vadd.f32 %v168, %v167
    %v170 = vsel %vm163, 0.0, %v169
    %vm171 = vcmp.gt.f32.partialorder %v170, 1.0
    %v172 = vsel %vm171, 1, 0
    %v173 = vcvt.s32.f32 %v172
    %174 = vst.msk [vmem:[#allocation3 + $0xc] sm:$0x3] %vm125, %v173
    %v175 = vld [vmem:[#allocation2 + $0xe] sm:$0x3]
    %v176 = vmul.f32 %v170, 0.96
    %v177 = vadd.f32 %v176, %v175
    %v178 = vsel %vm171, 0.0, %v177
    %vm179 = vcmp.gt.f32.partialorder %v178, 1.0
    %v180 = vsel %vm179, 1, 0
    %v181 = vcvt.s32.f32 %v180
    %182 = vst.msk [vmem:[#allocation3 + $0xe] sm:$0x3] %vm125, %v181
    %v183 = vld [vmem:[#allocation3] sm:$0xff]
    %v184 = vld [vmem:[#allocation3 + $0x8] sm:$0xff]
    %v185 = vld [vmem:[%s2] sm:$0xff]
    %v186 = vld [vmem:[%s2 + $0x8] sm:$0xff]
    %v187 = vld [vmem:[%s2 + $0x10] sm:$0xff]
    %v188 = vld [vmem:[%s2 + $0x18] sm:$0xff]
    %v190 = vsel %vm34, %v183, 0
    %v193 = vsel %vm34, %v184, 0
    %195 = vmatprep.subr.mxu0 0.0
    %196 = vmatpush1.msra.mxu0 %v185
    %197 = vmatprep.subr.mxu0 0.0
    %198 = vmatpush1.msra.mxu0 %v186
    %199 = vmatprep.subr.mxu0 0.0
    %200 = vmatpush1.msra.mxu0 %v187
    %201 = vmatprep.subr.mxu0 0.0
    %202 = vmatpush1.msra.mxu0 %v188
    %203 = vmatprep.subr.mxu0 0.0
    %204 = vmatpush1.msra.mxu0 0.0
    %205 = vmatprep.subr.mxu0 0.0
    %206 = vmatpush1.msra.mxu0 0.0
    %207 = vmatprep.subr.mxu0 0.0
    %208 = vmatpush1.msra.mxu0 0.0
    %209 = vmatprep.subr.mxu0 0.0
    %210 = vmatpush1.msra.mxu0 0.0
    %211 = vmatprep.subr.mxu0 0.0
    %212 = vmatpush1.msra.mxu0 0.0
    %213 = vmatprep.subr.mxu0 0.0
    %214 = vmatpush1.msra.mxu0 0.0
    %215 = vmatprep.subr.mxu0 0.0
    %216 = vmatpush1.msra.mxu0 0.0
    %217 = vmatprep.subr.mxu0 0.0
    %218 = vmatpush1.msra.mxu0 0.0
    %219 = vmatprep.subr.mxu0 0.0
    %220 = vmatpush1.msra.mxu0 0.0
    %221 = vmatprep.subr.mxu0 0.0
    %222 = vmatpush1.msra.mxu0 0.0
    %223 = vmatprep.subr.mxu0 0.0
    %224 = vmatpush1.msra.mxu0 0.0
    %225 = vmatprep.subr.mxu0 0.0
    %226 = vmatpush1.msra.mxu0 0.0
    %227 = vmatprep.subr.mxu0 0.0
    %228 = vmatpush1.msra.mxu0 0.0
    %229 = vmatprep.subr.mxu0 0.0
    %230 = vmatpush1.msra.mxu0 0.0
    %231 = vmatprep.subr.mxu0 0.0
    %232 = vmatpush1.msra.mxu0 0.0
    %233 = vmatprep.subr.mxu0 0.0
    %234 = vmatpush1.msra.mxu0 0.0
    %235 = vmatprep.subr.mxu0 0.0
    %236 = vmatpush1.msra.mxu0 0.0
    %237 = vmatprep.subr.mxu0 0.0
    %238 = vmatpush1.msra.mxu0 0.0
    %239 = vmatprep.subr.mxu0 0.0
    %240 = vmatpush1.msra.mxu0 0.0
    %241 = vmatprep.subr.mxu0 0.0
    %242 = vmatpush1.msra.mxu0 0.0
    %243 = vmatprep.subr.mxu0 0.0
    %244 = vmatpush1.msra.mxu0 0.0
    %245 = vmatprep.subr.mxu0 0.0
    %246 = vmatpush1.msra.mxu0 0.0
    %247 = vmatprep.subr.mxu0 0.0
    %248 = vmatpush1.msra.mxu0 0.0
    %249 = vmatprep.subr.mxu0 0.0
    %250 = vmatpush1.msra.mxu0 0.0
    %251 = vmatprep.subr.mxu0 0.0
    %252 = vmatpush1.msra.mxu0 0.0
    %253 = vmatprep.subr.mxu0 0.0
    %254 = vmatpush1.msra.mxu0 0.0
    %255 = vmatprep.subr.mxu0 0.0
    %256 = vmatpush1.msra.mxu0 0.0
    %257 = vmatprep.subr.mxu0 0.0
    %258 = vmatpush1.msra.mxu0 0.0
    %259 = vmatprep.mubr.f32.mxu0 0.0
    %260 = vmatmul.mubr.f32.gmra.mrb[0].mxu0 %v190
    %v261 = vpop.f32.mrb[0].mxu0
    %v262 = vadd.f32 0.0, %v261
    %v263 = vpop.f32.mrb[0].mxu0
    %264 = vmatprep.mubr.f32.mxu0 0.0
    %265 = vmatmul.mubr.f32.gmra.mrb[0].mxu0 %v193
    %v266 = vpop.f32.mrb[0].mxu0
    %v267 = vadd.f32 0.0, %v266
    %v268 = vpop.f32.mrb[0].mxu0
    %269 = vdwg.mxu0
    %vm270 = vcmask 15360
    %271 = vst.msk [vmem:[%s3] sm:$0xff] %vm270, %v262
    %272 = vst.msk [vmem:[%s3 + $0x8] sm:$0xff] %vm270, %v267
    %v273 = vld [vmem:[%s3] sm:$0x3]
    %v274 = vmul.f32 %v273, 0.96
    %v275 = vld [vmem:[%s3 + $0x2] sm:$0x3]
    %v276 = vadd.f32 %v274, %v275
    %vm277 = vcmask 9216
    %278 = vst.msk [vmem:[%s3 + $0x2] sm:$0x3] %vm277, %v276
    %v279 = vld [vmem:[%s3 + $0x2] sm:$0x3]
    %v280 = vmul.f32 %v279, 0.96
    %v281 = vld [vmem:[%s3 + $0x4] sm:$0x3]
    %v282 = vadd.f32 %v280, %v281
    %283 = vst.msk [vmem:[%s3 + $0x4] sm:$0x3] %vm277, %v282
    %v284 = vld [vmem:[%s3 + $0x4] sm:$0x3]
    %v285 = vmul.f32 %v284, 0.96
    %v286 = vld [vmem:[%s3 + $0x6] sm:$0x3]
    %v287 = vadd.f32 %v285, %v286
    %288 = vst.msk [vmem:[%s3 + $0x6] sm:$0x3] %vm277, %v287
    %v289 = vld [vmem:[%s3 + $0x6] sm:$0x3]
    %v290 = vmul.f32 %v289, 0.96
    %v291 = vld [vmem:[%s3 + $0x8] sm:$0x3]
    %v292 = vadd.f32 %v290, %v291
    %293 = vst.msk [vmem:[%s3 + $0x8] sm:$0x3] %vm277, %v292
    %v294 = vld [vmem:[%s3 + $0x8] sm:$0x3]
    %v295 = vmul.f32 %v294, 0.96
    %v296 = vld [vmem:[%s3 + $0xa] sm:$0x3]
    %v297 = vadd.f32 %v295, %v296
    %298 = vst.msk [vmem:[%s3 + $0xa] sm:$0x3] %vm277, %v297
    %v299 = vld [vmem:[%s3 + $0xa] sm:$0x3]
    %v300 = vmul.f32 %v299, 0.96
    %v301 = vld [vmem:[%s3 + $0xc] sm:$0x3]
    %v302 = vadd.f32 %v300, %v301
    %303 = vst.msk [vmem:[%s3 + $0xc] sm:$0x3] %vm277, %v302
    %v304 = vld [vmem:[%s3 + $0xc] sm:$0x3]
    %v305 = vmul.f32 %v304, 0.96
    %v306 = vld [vmem:[%s3 + $0xe] sm:$0x3]
    %v307 = vadd.f32 %v305, %v306
    %308 = vst.msk [vmem:[%s3 + $0xe] sm:$0x3] %vm277, %v307
    // Predicated region
    $region18: #{tpu_custom_call.1} parent=1 // pred_check
      _
    $region19: #{tpu_custom_call.1} parent=1 // pred_check_branch
      %310 = sbr.rel (0) target = $region21
    $region20: #{tpu_custom_call.1} parent=1 // pred_region
      _
    $region21: #{tpu_custom_call.1} parent=1 // pred_fallthru
      _
    // Predicated region
    $region22: #{tpu_custom_call.1} parent=1 // pred_check
      _
    $region23: #{tpu_custom_call.1} parent=1 // pred_check_branch
      %312 = sbr.rel (0) target = $region25
    $region24: #{tpu_custom_call.1} parent=1 // pred_region
      _
    $region25: #{tpu_custom_call.1} parent=1 // pred_fallthru
      _
    %313 = vsyncpa [#allocation5], 1

</llo_original>
